<compile_context>
chip_gen: v6e
topology: v6e:2x2x1
jax: 0.10.0
libtpu: 0.0.40
codegen_flags: <defaults>
</compile_context>

<pallas_src>
import jax
import jax.numpy as jnp
from jax.experimental import pallas as pl
from jax.experimental.pallas import tpu as pltpu


def _ffn_kernel(x_ref, w1_ref, b1_ref, w2_ref, b2_ref, o_ref):
    # x_ref : (C_in,  tile_s)  original dtype (f32)
    # w1_ref: (C_hid, C_in)    compute dtype (bf16)   b1_ref: (C_hid, 1) f32
    # w2_ref: (C_out, C_hid)   compute dtype (bf16)   b2_ref: (C_out, 1) f32
    # o_ref : (C_out, tile_s)  output dtype
    x = x_ref[...]                       # load once; reused for residual
    x_c = x.astype(w1_ref.dtype)         # bf16 copy for the MXU

    # fc1: 1x1 conv (= channel matmul) + folded-BN bias + GELU (tanh form)
    h = jnp.dot(w1_ref[...], x_c, preferred_element_type=jnp.float32)
    h = jax.nn.gelu(h + b1_ref[...], approximate=True)

    # fc2: 1x1 conv + folded-BN bias + GELU; cast back to bf16 for the MXU
    y = jnp.dot(w2_ref[...], h.astype(w2_ref.dtype),
                preferred_element_type=jnp.float32)
    y = jax.nn.gelu(y + b2_ref[...], approximate=True)

    # drop_path is identity (eval); residual add in exact f32, cast to output
    o_ref[...] = (y + x.astype(jnp.float32)).astype(o_ref.dtype)


def _round_up(x, m):
    return ((x + m - 1) // m) * m


def ffn_pallas(x_nchw, w1, b1, w2, b2, *, tile_s_target=2048,
               compute_dtype=jnp.bfloat16):
    """Fused FFN forward.

    x_nchw: (N, C, H, W)
    w1: (C_hid, C)  conv-style (out, in) weight with BN folded; b1: (C_hid,)
    w2: (C_out, C_hid);                                         b2: (C_out,)
    """
    N, C, H, W = x_nchw.shape
    C_hid, C_in = w1.shape
    C_out = w2.shape[0]
    assert C_in == C and C_out == C, "residual requires out_features == in_features"

    S = H * W
    out_dtype = x_nchw.dtype

    # NCHW -> (N, C, S): pure reshape, no transpose / extra HBM pass.
    x3 = x_nchw.reshape(N, C, S)

    # Lane-dense spatial tiling: tile is a multiple of 128 lanes; pad S if needed.
    tile_s = min(_round_up(tile_s_target, 128), _round_up(S, 128))
    S_pad = _round_up(S, tile_s)
    if S_pad != S:
        x3 = jnp.pad(x3, ((0, 0), (0, 0), (0, S_pad - S)))

    # Tiny, grid-resident params: cast once on the host side.
    w1c = w1.astype(compute_dtype)
    w2c = w2.astype(compute_dtype)
    b1c = b1.reshape(C_hid, 1).astype(jnp.float32)
    b2c = b2.reshape(C_out, 1).astype(jnp.float32)

    grid = (N, S_pad // tile_s)

    out3 = pl.pallas_call(
        _ffn_kernel,
        out_shape=jax.ShapeDtypeStruct((N, C_out, S_pad), out_dtype),
        grid_spec=pltpu.PrefetchScalarGridSpec(
            num_scalar_prefetch=0,
            grid=grid,
            in_specs=[
                pl.BlockSpec((None, C, tile_s), lambda n, s: (n, 0, s)),  # x tile
                pl.BlockSpec((C_hid, C), lambda n, s: (0, 0)),            # w1 (resident)
                pl.BlockSpec((C_hid, 1), lambda n, s: (0, 0)),            # b1
                pl.BlockSpec((C_out, C_hid), lambda n, s: (0, 0)),        # w2 (resident)
                pl.BlockSpec((C_out, 1), lambda n, s: (0, 0)),            # b2
            ],
            out_specs=pl.BlockSpec((None, C_out, tile_s), lambda n, s: (n, 0, s)),
        ),
        compiler_params=pltpu.CompilerParams(
            dimension_semantics=("parallel", "parallel"),
            vmem_limit_bytes=48 * 1024 * 1024,
        ),
    )(x3, w1c, b1c, w2c, b2c)

    if S_pad != S:
        out3 = out3[:, :, :S]
    return out3.reshape(N, C_out, H, W)


def make_params(key, in_features, hidden_features):
    """Deterministic synthetic parameters; BN folded with PyTorch default init."""
    k1, k2, k3, k4 = jax.random.split(key, 4)
    # Conv2d(in, hid, 1): weight (hid, in, 1, 1) -> (hid, in); bias (hid,)
    w1_conv = jax.random.normal(k1, (hidden_features, in_features), jnp.float32) * 0.1
    b1_conv = jax.random.normal(k2, (hidden_features,), jnp.float32) * 0.1
    w2_conv = jax.random.normal(k3, (in_features, hidden_features), jnp.float32) * 0.1
    b2_conv = jax.random.normal(k4, (in_features,), jnp.float32) * 0.1

    # BatchNorm2d default init: gamma=1, beta=0, running_mean=0, running_var=1.
    eps = 1e-5

    def fold_bn(w, b, gamma, beta, mean, var):
        scale = gamma / jnp.sqrt(var + eps)
        return w * scale[:, None], (b - mean) * scale + beta

    g1 = jnp.ones((hidden_features,)); be1 = jnp.zeros((hidden_features,))
    m1 = jnp.zeros((hidden_features,)); v1 = jnp.ones((hidden_features,))
    g2 = jnp.ones((in_features,));      be2 = jnp.zeros((in_features,))
    m2 = jnp.zeros((in_features,));     v2 = jnp.ones((in_features,))

    w1, b1 = fold_bn(w1_conv, b1_conv, g1, be1, m1, v1)
    w2, b2 = fold_bn(w2_conv, b2_conv, g2, be2, m2, v2)
    return w1, b1, w2, b2


def ffn_reference(x_nchw, w1, b1, w2, b2):
    """Plain-JAX f32 / exact-GELU reference of the module's forward pass."""
    N, C, H, W = x_nchw.shape
    x3 = x_nchw.reshape(N, C, H * W)
    h = jax.nn.gelu(jnp.einsum('oc,ncs->nos', w1, x3) + b1[None, :, None],
                    approximate=False)
    y = jax.nn.gelu(jnp.einsum('oh,nhs->nos', w2, h) + b2[None, :, None],
                    approximate=False)
    y = y + x3
    return y.reshape(N, -1, H, W)


if __name__ == "__main__":
    key = jax.random.PRNGKey(0)
    kx, kp = jax.random.split(key)

    N, C, H, W = 2, 4, 16, 16        # NCHW input, in_features = 4
    hidden = 8                        # hidden_features

    x = jax.random.normal(kx, (N, C, H, W), jnp.float32)
    w1, b1, w2, b2 = make_params(kp, C, hidden)

    out = ffn_pallas(x, w1, b1, w2, b2)
    out = jax.block_until_ready(out)

    ref = ffn_reference(x, w1, b1, w2, b2)
    assert out.shape == (N, C, H, W)
    # bf16 matmuls + tanh-GELU vs f32 exact-GELU reference: tolerance covers
    # bf16 rounding of the matmul inputs (~1e-2 worst case at |x|~3.5).
    assert jnp.allclose(out, ref, atol=3e-2, rtol=3e-2), "mismatch vs reference"

    print("KERNEL_OK")
</pallas_src>

<mosaic_0001>
module attributes {stable_mosaic.version = 11 : i64} {
  func.func @_ffn_kernel(%arg0: i32, %arg1: i32, %arg2: memref<1x4x256xf32, #tpu.memory_space<vmem>>, %arg3: memref<8x4xbf16, #tpu.memory_space<vmem>>, %arg4: memref<8x1xf32, #tpu.memory_space<vmem>>, %arg5: memref<4x8xbf16, #tpu.memory_space<vmem>>, %arg6: memref<4x1xf32, #tpu.memory_space<vmem>>, %arg7: memref<1x4x256xf32, #tpu.memory_space<vmem>>) attributes {dimension_semantics = [#tpu.dimension_semantics<parallel>, #tpu.dimension_semantics<parallel>], iteration_bounds = array<i64: 2, 1>, scalar_prefetch = 0 : i64, scratch_operands = 0 : i64, tpu.core_type = #tpu.core_type<tc>, window_params = [{transform_indices = @transform_0, window_bounds = array<i64: 1, 4, 256>}, {pipeline_mode = #tpu.pipeline_mode<synchronous>, transform_indices = @transform_1, window_bounds = array<i64: 8, 4>}, {pipeline_mode = #tpu.pipeline_mode<synchronous>, transform_indices = @transform_2, window_bounds = array<i64: 8, 1>}, {pipeline_mode = #tpu.pipeline_mode<synchronous>, transform_indices = @transform_3, window_bounds = array<i64: 4, 8>}, {pipeline_mode = #tpu.pipeline_mode<synchronous>, transform_indices = @transform_4, window_bounds = array<i64: 4, 1>}, {transform_indices = @transform_5, window_bounds = array<i64: 1, 4, 256>}]} {
    %c0 = arith.constant 0 : index
    %c0_0 = arith.constant 0 : index
    %c0_1 = arith.constant 0 : index
    %0 = vector.load %arg2[%c0, %c0_0, %c0_1] : memref<1x4x256xf32, #tpu.memory_space<vmem>>, vector<1x4x256xf32>
    %1 = vector.shape_cast %0 : vector<1x4x256xf32> to vector<4x256xf32>
    %2 = arith.truncf %1 : vector<4x256xf32> to vector<4x256xbf16>
    %c0_2 = arith.constant 0 : index
    %c0_3 = arith.constant 0 : index
    %3 = vector.load %arg3[%c0_2, %c0_3] : memref<8x4xbf16, #tpu.memory_space<vmem>>, vector<8x4xbf16>
    %cst = arith.constant dense<0.000000e+00> : vector<8x256xf32>
    %4 = tpu.matmul %3, %2, %cst {dimension_numbers = #tpu.dot_dimension_numbers<[1], [0], [0], [1], [0, 0, 1, 1], [], []>} : vector<8x4xbf16>, vector<4x256xbf16>, vector<8x256xf32> -> vector<8x256xf32>
    %c0_4 = arith.constant 0 : index
    %c0_5 = arith.constant 0 : index
    %5 = vector.load %arg4[%c0_4, %c0_5] : memref<8x1xf32, #tpu.memory_space<vmem>>, vector<8x1xf32>
    %6 = vector.broadcast %5 : vector<8x1xf32> to vector<8x256xf32>
    %7 = arith.addf %4, %6 : vector<8x256xf32>
    %8 = arith.mulf %7, %7 : vector<8x256xf32>
    %9 = arith.mulf %7, %8 : vector<8x256xf32>
    %cst_6 = arith.constant 4.471500e-02 : f32
    %10 = vector.broadcast %cst_6 : f32 to vector<8x256xf32>
    %11 = arith.mulf %10, %9 : vector<8x256xf32>
    %12 = arith.addf %7, %11 : vector<8x256xf32>
    %cst_7 = arith.constant 0.797884583 : f32
    %13 = vector.broadcast %cst_7 : f32 to vector<8x256xf32>
    %14 = arith.mulf %13, %12 : vector<8x256xf32>
    %15 = math.tanh %14 : vector<8x256xf32>
    %cst_8 = arith.constant 1.000000e+00 : f32
    %16 = vector.broadcast %cst_8 : f32 to vector<8x256xf32>
    %17 = arith.addf %16, %15 : vector<8x256xf32>
    %cst_9 = arith.constant 5.000000e-01 : f32
    %18 = vector.broadcast %cst_9 : f32 to vector<8x256xf32>
    %19 = arith.mulf %18, %17 : vector<8x256xf32>
    %20 = arith.mulf %7, %19 : vector<8x256xf32>
    %c0_10 = arith.constant 0 : index
    %c0_11 = arith.constant 0 : index
    %21 = vector.load %arg5[%c0_10, %c0_11] : memref<4x8xbf16, #tpu.memory_space<vmem>>, vector<4x8xbf16>
    %22 = arith.truncf %20 : vector<8x256xf32> to vector<8x256xbf16>
    %cst_12 = arith.constant dense<0.000000e+00> : vector<4x256xf32>
    %23 = tpu.matmul %21, %22, %cst_12 {dimension_numbers = #tpu.dot_dimension_numbers<[1], [0], [0], [1], [0, 0, 1, 1], [], []>} : vector<4x8xbf16>, vector<8x256xbf16>, vector<4x256xf32> -> vector<4x256xf32>
    %c0_13 = arith.constant 0 : index
    %c0_14 = arith.constant 0 : index
    %24 = vector.load %arg6[%c0_13, %c0_14] : memref<4x1xf32, #tpu.memory_space<vmem>>, vector<4x1xf32>
    %25 = vector.broadcast %24 : vector<4x1xf32> to vector<4x256xf32>
    %26 = arith.addf %23, %25 : vector<4x256xf32>
    %27 = arith.mulf %26, %26 : vector<4x256xf32>
    %28 = arith.mulf %26, %27 : vector<4x256xf32>
    %cst_15 = arith.constant 4.471500e-02 : f32
    %29 = vector.broadcast %cst_15 : f32 to vector<4x256xf32>
    %30 = arith.mulf %29, %28 : vector<4x256xf32>
    %31 = arith.addf %26, %30 : vector<4x256xf32>
    %cst_16 = arith.constant 0.797884583 : f32
    %32 = vector.broadcast %cst_16 : f32 to vector<4x256xf32>
    %33 = arith.mulf %32, %31 : vector<4x256xf32>
    %34 = math.tanh %33 : vector<4x256xf32>
    %cst_17 = arith.constant 1.000000e+00 : f32
    %35 = vector.broadcast %cst_17 : f32 to vector<4x256xf32>
    %36 = arith.addf %35, %34 : vector<4x256xf32>
    %cst_18 = arith.constant 5.000000e-01 : f32
    %37 = vector.broadcast %cst_18 : f32 to vector<4x256xf32>
    %38 = arith.mulf %37, %36 : vector<4x256xf32>
    %39 = arith.mulf %26, %38 : vector<4x256xf32>
    %40 = arith.addf %39, %1 : vector<4x256xf32>
    %c0_19 = arith.constant 0 : index
    %c0_20 = arith.constant 0 : index
    %c0_21 = arith.constant 0 : index
    %41 = vector.load %arg7[%c0_19, %c0_20, %c0_21] : memref<1x4x256xf32, #tpu.memory_space<vmem>>, vector<1x4x256xf32>
    %42 = vector.shape_cast %41 : vector<1x4x256xf32> to vector<4x256xf32>
    %43 = vector.shape_cast %40 : vector<4x256xf32> to vector<1x4x256xf32>
    tpu.vector_store %arg7[%c0_19, %c0_20, %c0_21], %43 {strides = array<i32>} : memref<1x4x256xf32, #tpu.memory_space<vmem>>, vector<1x4x256xf32>,
    return
  }
  func.func @transform_0(%arg0: i32, %arg1: i32) -> (i32, i32, i32) {
    %c0_i32 = arith.constant 0 : i32
    %c0_i32_0 = arith.constant 0 : i32
    return %arg0, %c0_i32, %arg1 : i32, i32, i32
  }
  func.func @transform_1(%arg0: i32, %arg1: i32) -> (i32, i32) {
    %c0_i32 = arith.constant 0 : i32
    %c0_i32_0 = arith.constant 0 : i32
    %c0_i32_1 = arith.constant 0 : i32
    return %c0_i32, %c0_i32_0 : i32, i32
  }
  func.func @transform_2(%arg0: i32, %arg1: i32) -> (i32, i32) {
    %c0_i32 = arith.constant 0 : i32
    %c0_i32_0 = arith.constant 0 : i32
    %c0_i32_1 = arith.constant 0 : i32
    return %c0_i32, %c0_i32_0 : i32, i32
  }
  func.func @transform_3(%arg0: i32, %arg1: i32) -> (i32, i32) {
    %c0_i32 = arith.constant 0 : i32
    %c0_i32_0 = arith.constant 0 : i32
    %c0_i32_1 = arith.constant 0 : i32
    return %c0_i32, %c0_i32_0 : i32, i32
  }
  func.func @transform_4(%arg0: i32, %arg1: i32) -> (i32, i32) {
    %c0_i32 = arith.constant 0 : i32
    %c0_i32_0 = arith.constant 0 : i32
    %c0_i32_1 = arith.constant 0 : i32
    return %c0_i32, %c0_i32_0 : i32, i32
  }
  func.func @transform_5(%arg0: i32, %arg1: i32) -> (i32, i32, i32) {
    %c0_i32 = arith.constant 0 : i32
    %c0_i32_0 = arith.constant 0 : i32
    return %arg0, %c0_i32, %arg1 : i32, i32, i32
  }
}

</mosaic_0001>

<llo_original>
// kernel: tpu_custom_call.1
$region0: #{tpu_custom_call.1}
  #allocation0 [shape = 'u32[]', space=smem, size = 0x4, offset = 0x4, fixed_abs, tag = 'smem constant byte address 0x4 - core index']
  #allocation1 [shape = 'u32[144,128]{1,0:T(1,128)}', space=vmem, size = 0x12000, scoped, tag = 'internal scratch']
  %s0 = inlined_call_operand.vmem [shape: f32[2,4,256], index: 0, kind: input, shape index: {}]
  %s1 = inlined_call_operand.vmem [shape: bf16[8,4], index: 1, kind: input, shape index: {}]
  %s2 = inlined_call_operand.vmem [shape: f32[8,1], index: 2, kind: input, shape index: {}]
  %s3 = inlined_call_operand.vmem [shape: bf16[4,8], index: 3, kind: input, shape index: {}]
  %s4 = inlined_call_operand.vmem [shape: f32[4,1], index: 4, kind: input, shape index: {}]
  %s5 = inlined_call_operand.hbm [shape: f32[2,4,256], index: 5, kind: output, shape index: {}]
  %s6 = sld [smem:[#allocation0]]
  $region53: #{tpu_custom_call.1} parent=0
    _
  %s8 = ssub.s32 1, %s6
  %s9 = scalar_select 0, %s8, %s6
  $region1: #{tpu_custom_call.1} parent=0
    #allocation2 [shape = 'u8[8192]{0}', space=vmem, size = 0x2000, scoped, tag = 'output window, operand 0']
    #allocation3 [shape = 's32[2]{0}', space=sflag, size = 0x8, scoped, tag = 'scoped memory for tpu_custom_call.1']
    %10 = vsyncpa [#allocation3], 0
    %s11 = scalar_lea.sflag [#allocation3], 1
    %12 = vsyncpa %s11, 0
    loop: start=0, step=1, limit=4
    $region2: #{tpu_custom_call.1} parent=1 // loop_pre_header
      _
    $region3: #{tpu_custom_call.1} parent=1 // loop_header
      %s14 = sphi 0, %s18
      %p15 = scmp.ge.s32.totalorder %s14, 4
      %s21 = sphi 0, %s33
      %s22 = sphi 0, %s29
      %s23 = sphi 0, %s21
      %s24 = sphi 0, %s22
      %s25 = sphi 0, %s23
      %s26 = sphi 0, %s24
      %s38 = sphi 0, %s40
      %s41 = sphi 0, %s38
      %s42 = sphi 0, %s41
      %s58 = sphi 0, %s42
      %s62 = sphi 0, %s62
      %s64 = sphi 0, %s62
      %s65 = sphi 0, %s64
      %s79 = sphi 0, %s65
      %s83 = sphi 0, %s83
      %s85 = sphi 0, %s83
      %s86 = sphi 0, %s85
      %s100 = sphi 0, %s86
      %s104 = sphi 0, %s104
      %s106 = sphi 0, %s104
      %s107 = sphi 0, %s106
      %s121 = sphi 0, %s107
      %s125 = sphi 0, %s125
      %s127 = sphi 0, %s125
      %s128 = sphi 0, %s127
      %s142 = sphi 0, %s128
      %s150 = sphi 0, %s152
      %s153 = sphi 0, %s150
      %s154 = sphi 0, %s153
      %s170 = sphi 0, %s154
    $region4: #{tpu_custom_call.1} parent=1 // loop_header_branch
      %17 = sbr.rel (%p15) target = $region8
    $region5: #{tpu_custom_call.1} parent=1 // loop_body
      %s19 = ssub.s32 %s14, 1
      %s20 = ssub.s32 %s14, 2
      %s27 = sadd.s32 1, %s22
      %p28 = scmp.ge.s32.totalorder %s27, 1
      %s29 = scalar_select %p28, 0, %s27
      %s30 = sadd.s32 1, %s21
      %s31 = scalar_select %p28, %s30, %s21
      %p32 = scmp.ge.s32.totalorder %s31, 2
      %s33 = scalar_select %p32, 0, %s31
      %s34 = ssub.s32 %s21, %s33
      %s35 = ssub.s32 %s22, %s29
      %s36 = sor.u32 %s34, %s35
      %p37 = scmp.eq.s32.totalorder %s36, 0
      %s39 = sadd.s32 %s38, 1
      %s40 = scalar_select %p37, %s38, %s39
      %p43 = pneg %p37
      %p44 = scmp.eq.s32.totalorder %s14, 1
      %p45 = por %p43, %p44
      %p46 = scmp.ne.s32.totalorder %s38, %s41
      %p47 = scmp.eq.s32.totalorder %s14, 0
      %p48 = por %p46, %p47
      %p49 = scmp.ne.s32.totalorder %s38, %s41
      %p50 = scmp.eq.s32.totalorder %s19, 1
      %p51 = por %p49, %p50
      %p52 = scmp.ne.s32.totalorder %s41, %s42
      %p53 = scmp.eq.s32.totalorder %s19, 0
      %p54 = por %p52, %p53
      %p55 = scmp.ne.s32.totalorder %s41, %s42
      %p56 = scmp.eq.s32.totalorder %s20, 1
      %p57 = por %p55, %p56
      %p59 = scmp.ne.s32.totalorder %s42, %s58
      %p60 = scmp.eq.s32.totalorder %s20, 0
      %p61 = por %p59, %p60
      %s63 = sadd.s32 %s62, 1
      %p66 = scmp.eq.s32.totalorder %s14, 1
      %p67 = scmp.ne.s32.totalorder %s62, %s64
      %p68 = scmp.eq.s32.totalorder %s14, 0
      %p69 = por %p67, %p68
      %p70 = scmp.ne.s32.totalorder %s62, %s64
      %p71 = scmp.eq.s32.totalorder %s19, 1
      %p72 = por %p70, %p71
      %p73 = scmp.ne.s32.totalorder %s64, %s65
      %p74 = scmp.eq.s32.totalorder %s19, 0
      %p75 = por %p73, %p74
      %p76 = scmp.ne.s32.totalorder %s64, %s65
      %p77 = scmp.eq.s32.totalorder %s20, 1
      %p78 = por %p76, %p77
      %p80 = scmp.ne.s32.totalorder %s65, %s79
      %p81 = scmp.eq.s32.totalorder %s20, 0
      %p82 = por %p80, %p81
      %s84 = sadd.s32 %s83, 1
      %p87 = scmp.eq.s32.totalorder %s14, 1
      %p88 = scmp.ne.s32.totalorder %s83, %s85
      %p89 = scmp.eq.s32.totalorder %s14, 0
      %p90 = por %p88, %p89
      %p91 = scmp.ne.s32.totalorder %s83, %s85
      %p92 = scmp.eq.s32.totalorder %s19, 1
      %p93 = por %p91, %p92
      %p94 = scmp.ne.s32.totalorder %s85, %s86
      %p95 = scmp.eq.s32.totalorder %s19, 0
      %p96 = por %p94, %p95
      %p97 = scmp.ne.s32.totalorder %s85, %s86
      %p98 = scmp.eq.s32.totalorder %s20, 1
      %p99 = por %p97, %p98
      %p101 = scmp.ne.s32.totalorder %s86, %s100
      %p102 = scmp.eq.s32.totalorder %s20, 0
      %p103 = por %p101, %p102
      %s105 = sadd.s32 %s104, 1
      %p108 = scmp.eq.s32.totalorder %s14, 1
      %p109 = scmp.ne.s32.totalorder %s104, %s106
      %p110 = scmp.eq.s32.totalorder %s14, 0
      %p111 = por %p109, %p110
      %p112 = scmp.ne.s32.totalorder %s104, %s106
      %p113 = scmp.eq.s32.totalorder %s19, 1
      %p114 = por %p112, %p113
      %p115 = scmp.ne.s32.totalorder %s106, %s107
      %p116 = scmp.eq.s32.totalorder %s19, 0
      %p117 = por %p115, %p116
      %p118 = scmp.ne.s32.totalorder %s106, %s107
      %p119 = scmp.eq.s32.totalorder %s20, 1
      %p120 = por %p118, %p119
      %p122 = scmp.ne.s32.totalorder %s107, %s121
      %p123 = scmp.eq.s32.totalorder %s20, 0
      %p124 = por %p122, %p123
      %s126 = sadd.s32 %s125, 1
      %p129 = scmp.eq.s32.totalorder %s14, 1
      %p130 = scmp.ne.s32.totalorder %s125, %s127
      %p131 = scmp.eq.s32.totalorder %s14, 0
      %p132 = por %p130, %p131
      %p133 = scmp.ne.s32.totalorder %s125, %s127
      %p134 = scmp.eq.s32.totalorder %s19, 1
      %p135 = por %p133, %p134
      %p136 = scmp.ne.s32.totalorder %s127, %s128
      %p137 = scmp.eq.s32.totalorder %s19, 0
      %p138 = por %p136, %p137
      %p139 = scmp.ne.s32.totalorder %s127, %s128
      %p140 = scmp.eq.s32.totalorder %s20, 1
      %p141 = por %p139, %p140
      %p143 = scmp.ne.s32.totalorder %s128, %s142
      %p144 = scmp.eq.s32.totalorder %s20, 0
      %p145 = por %p143, %p144
      %s146 = ssub.s32 %s21, %s33
      %s147 = ssub.s32 %s22, %s29
      %s148 = sor.u32 %s146, %s147
      %p149 = scmp.eq.s32.totalorder %s148, 0
      %s151 = sadd.s32 %s150, 1
      %s152 = scalar_select %p149, %s150, %s151
      %p155 = pneg %p149
      %p156 = scmp.eq.s32.totalorder %s14, 1
      %p157 = por %p155, %p156
      %p158 = scmp.ne.s32.totalorder %s150, %s153
      %p159 = scmp.eq.s32.totalorder %s14, 0
      %p160 = por %p158, %p159
      %p161 = scmp.ne.s32.totalorder %s150, %s153
      %p162 = scmp.eq.s32.totalorder %s19, 1
      %p163 = por %p161, %p162
      %p164 = scmp.ne.s32.totalorder %s153, %s154
      %p165 = scmp.eq.s32.totalorder %s19, 0
      %p166 = por %p164, %p165
      %p167 = scmp.ne.s32.totalorder %s153, %s154
      %p168 = scmp.eq.s32.totalorder %s20, 1
      %p169 = por %p167, %p168
      %p171 = scmp.ne.s32.totalorder %s154, %s170
      %p172 = scmp.eq.s32.totalorder %s20, 0
      %p173 = por %p171, %p172
      %p174 = scmp.le.s32.totalorder 1, %s14
      %p175 = scmp.lt.s32.totalorder %s14, 3
      %p176 = pnand %p174, %p175
      %p177 = pneg %p176
      // Predicated region
      $region9: #{tpu_custom_call.1} parent=5 // pred_check
        _
      $region10: #{tpu_custom_call.1} parent=5 // pred_check_branch
        %179 = sbr.rel (%p176) target = $region12
      $region11: #{tpu_custom_call.1} parent=5 // pred_region
        %s180 = ssub.s32 %s14, 1
        // Predicated region
        $region13: #{tpu_custom_call.1} parent=11 // pred_check
          %p181 = pneg %p75
        $region14: #{tpu_custom_call.1} parent=11 // pred_check_branch
          %183 = sbr.rel (%p181) target = $region16
        $region15: #{tpu_custom_call.1} parent=11 // pred_region
          _
        $region16: #{tpu_custom_call.1} parent=11 // pred_fallthru
          _
        // Predicated region
        $region17: #{tpu_custom_call.1} parent=11 // pred_check
          %p184 = pneg %p96
        $region18: #{tpu_custom_call.1} parent=11 // pred_check_branch
          %186 = sbr.rel (%p184) target = $region20
        $region19: #{tpu_custom_call.1} parent=11 // pred_region
          _
        $region20: #{tpu_custom_call.1} parent=11 // pred_fallthru
          _
        // Predicated region
        $region21: #{tpu_custom_call.1} parent=11 // pred_check
          %p187 = pneg %p117
        $region22: #{tpu_custom_call.1} parent=11 // pred_check_branch
          %189 = sbr.rel (%p187) target = $region24
        $region23: #{tpu_custom_call.1} parent=11 // pred_region
          _
        $region24: #{tpu_custom_call.1} parent=11 // pred_fallthru
          _
        // Predicated region
        $region25: #{tpu_custom_call.1} parent=11 // pred_check
          %p190 = pneg %p138
        $region26: #{tpu_custom_call.1} parent=11 // pred_check_branch
          %192 = sbr.rel (%p190) target = $region28
        $region27: #{tpu_custom_call.1} parent=11 // pred_region
          _
        $region28: #{tpu_custom_call.1} parent=11 // pred_fallthru
          _
      $region12: #{tpu_custom_call.1} parent=5 // pred_fallthru
        _
      %p193 = scmp.lt.s32.totalorder %s14, 2
      // Predicated region
      $region29: #{tpu_custom_call.1} parent=5 // pred_check
        %p194 = pneg %p193
      $region30: #{tpu_custom_call.1} parent=5 // pred_check_branch
        %196 = sbr.rel (%p194) target = $region32
      $region31: #{tpu_custom_call.1} parent=5 // pred_region
        // Predicated region
        $region33: #{tpu_custom_call.1} parent=31 // pred_check
          %p197 = pneg %p48
        $region34: #{tpu_custom_call.1} parent=31 // pred_check_branch
          %199 = sbr.rel (%p197) target = $region36
        $region35: #{tpu_custom_call.1} parent=31 // pred_region
          %s200 = smul.u32 2, %s22
          %p201 = scmp.lt.s32.totalorder %s21, 1
          %s202 = scalar_select %p201, %s21, 1
          %p203 = scmp.lt.s32.totalorder %s200, 1
          %s204 = scalar_select %p203, %s200, 1
          %s205 = smul.addr %s202, 2
          %s206 = sadd.s32 %s204, %s205
          %s207 = smul.addr %s206, 4
          %s208 = scalar_lea.vmem %s0, %s207
          %s209 = smul.u32 2, %s22
        $region36: #{tpu_custom_call.1} parent=31 // pred_fallthru
          _
      $region32: #{tpu_custom_call.1} parent=5 // pred_fallthru
        _
      %p210 = scmp.le.s32.totalorder 1, %s14
      %p211 = scmp.lt.s32.totalorder %s14, 3
      %p212 = pnand %p210, %p211
      %p213 = pneg %p212
      // Predicated region
      $region37: #{tpu_custom_call.1} parent=5 // pred_check
        _
      $region38: #{tpu_custom_call.1} parent=5 // pred_check_branch
        %215 = sbr.rel (%p212) target = $region40
      $region39: #{tpu_custom_call.1} parent=5 // pred_region
        %s216 = ssub.s32 %s14, 1
        %s217 = smul.u32 2, %s24
        %p218 = scmp.lt.s32.totalorder %s23, 1
        %s219 = scalar_select %p218, %s23, 1
        %p220 = scmp.lt.s32.totalorder %s217, 1
        %s221 = scalar_select %p220, %s217, 1
        %s222 = smul.addr %s219, 2
        %s223 = sadd.s32 %s221, %s222
        %s224 = smul.addr %s223, 4
        %s225 = scalar_lea.vmem %s0, %s224
        %p226 = pneg %p54
        %p227 = pneg %p51
        %p228 = pneg %p75
        %p229 = pneg %p72
        %p230 = pneg %p96
        %p231 = pneg %p93
        %p232 = pneg %p117
        %p233 = pneg %p114
        %p234 = pneg %p138
        %p235 = pneg %p135
        %p236 = pneg %p166
        %p237 = pneg %p163
        %s238 = sand.u32 %s153, 1
        %s239 = scalar_lea.sflag [#allocation3], %s238
        %s240 = sand.u32 %s153, 1
        %s241 = smul.addr %s240, 8
        %s242 = scalar_lea.vmem [#allocation2], %s241
        %s243 = smul.u32 2, %s24
        %p244 = scmp.lt.s32.totalorder %s23, 1
        %s245 = scalar_select %p244, %s23, 1
        %p246 = scmp.lt.s32.totalorder %s243, 1
        %s247 = scalar_select %p246, %s243, 1
        %s248 = smul.addr %s245, 2
        %s249 = sadd.s32 %s247, %s248
        %s250 = smul.addr %s249, 4
        %s251 = scalar_lea.vmem %s0, %s250
        %s252 = smul.u32 2, %s24
        %s253 = smul.u32 2, %s24
        %v255 = vld [vmem:[%s251] sm:$0xff]
        %v257 = vcombine.high %v255, %v255
        %v259 = vpack.c.bf16 %v255, %v255
        %v260 = vpack.c.bf16 %v257, %v257
        %v261 = vld [vmem:[%s1] sm:$0xf]
        %v262 = vld [vmem:[%s2] sm:$0xff]
        %264 = vset.pattern.permute.xlu0 0
        %265 = vperm.xlu0 %264, %v262
        %v266 = vpop.permute.xlu0 %265
        %vm268 = vcmask 31744
        %v270 = vsel %vm268, %v261, 0
        %vm272 = vcmask 1041408
        %v274 = vsel %vm272, %v259, 0
        %v277 = vsel %vm272, %v260, 0
        %279 = vmatprep.subr.bf16.mxu0 0
        %280 = vmatpush1.bf16.msra.mxu0 0
        %281 = vmatprep.subr.bf16.mxu0 0
        %282 = vmatpush1.bf16.msra.mxu0 0
        %283 = vmatprep.subr.bf16.mxu0 0
        %284 = vmatpush1.bf16.msra.mxu0 0
        %285 = vmatprep.subr.bf16.mxu0 0
        %286 = vmatpush1.bf16.msra.mxu0 0
        %287 = vmatprep.subr.bf16.mxu0 0
        %288 = vmatpush1.bf16.msra.mxu0 0
        %289 = vmatprep.subr.bf16.mxu0 0
        %290 = vmatpush1.bf16.msra.mxu0 0
        %291 = vmatprep.subr.bf16.mxu0 0
        %292 = vmatpush1.bf16.msra.mxu0 0
        %293 = vmatprep.subr.bf16.mxu0 %v277
        %294 = vmatpush1.bf16.msra.mxu0 %v274
        %295 = vmatprep.subr.bf16.mxu0 0
        %296 = vmatpush2.bf16.msra.mxu0 0
        %297 = vmatprep.subr.bf16.mxu0 0
        %298 = vmatpush2.bf16.msra.mxu0 0
        %299 = vmatprep.subr.bf16.mxu0 0
        %300 = vmatpush2.bf16.msra.mxu0 0
        %301 = vmatprep.subr.bf16.mxu0 0
        %302 = vmatpush2.bf16.msra.mxu0 0
        %303 = vmatprep.subr.bf16.mxu0 0
        %304 = vmatpush2.bf16.msra.mxu0 0
        %305 = vmatprep.subr.bf16.mxu0 0
        %306 = vmatpush2.bf16.msra.mxu0 0
        %307 = vmatprep.subr.bf16.mxu0 0
        %308 = vmatpush2.bf16.msra.mxu0 0
        %309 = vmatprep.subr.bf16.mxu0 0
        %310 = vmatpush2.bf16.msra.mxu0 0
        %311 = vmatprep.mubr.bf16.mxu0 0
        %312 = vmatmul.mubr.bf16.gmra.mxu0 %v270
        %v313 = vpop.f32.mrf.mxu0
        %v314 = vadd.f32 %v266, %v313
        %v315 = vpop.f32.mrf.mxu0
        %v316 = vadd.f32 %v266, %v315
        %v317 = vpop.f32.mrf.mxu0
        %v318 = vpop.f32.mrf.mxu0
        %319 = vdwg.mxu0
        %v320 = vmul.f32 %v314, %v314
        %v321 = vmul.f32 %v316, %v316
        %v322 = vmul.f32 %v314, %v320
        %v323 = vmul.f32 %v316, %v321
        %v324 = vmul.f32 %v322, 0.044715
        %v325 = vmul.f32 %v323, 0.044715
        %v326 = vadd.f32 %v314, %v324
        %v327 = vadd.f32 %v316, %v325
        %v328 = vmul.f32 %v326, 0.7978846
        %v329 = vmul.f32 %v327, 0.7978846
        %v330 = vtanh.pop %v328
        %v331 = vtanh.pop %v329
        %v332 = vadd.f32 %v330, 1.0
        %v333 = vadd.f32 %v331, 1.0
        %v334 = vmul.f32 %v332, 0.5
        %v335 = vmul.f32 %v333, 0.5
        %v336 = vmul.f32 %v314, %v334
        %v337 = vmul.f32 %v316, %v335
        %v338 = vld [vmem:[%s3] sm:$0x3]
        %v339 = vpack.c.bf16 %v336, %v336
        %v340 = vpack.c.bf16 %v337, %v337
        %v341 = vld [vmem:[%s4] sm:$0xf]
        %343 = vset.pattern.permute.xlu0 0
        %344 = vperm.xlu0 %343, %v341
        %v345 = vpop.permute.xlu0 %344
        %vm347 = vcmask 64512
        %v349 = vsel %vm347, %v338, 0
        %vm351 = vcmask 1043456
        %v353 = vsel %vm351, %v339, 0
        %v356 = vsel %vm351, %v340, 0
        %358 = vmatprep.subr.bf16.mxu0 0
        %359 = vmatpush1.bf16.msra.mxu0 0
        %360 = vmatprep.subr.bf16.mxu0 0
        %361 = vmatpush1.bf16.msra.mxu0 0
        %362 = vmatprep.subr.bf16.mxu0 0
        %363 = vmatpush1.bf16.msra.mxu0 0
        %364 = vmatprep.subr.bf16.mxu0 0
        %365 = vmatpush1.bf16.msra.mxu0 0
        %366 = vmatprep.subr.bf16.mxu0 0
        %367 = vmatpush1.bf16.msra.mxu0 0
        %368 = vmatprep.subr.bf16.mxu0 0
        %369 = vmatpush1.bf16.msra.mxu0 0
        %370 = vmatprep.subr.bf16.mxu0 0
        %371 = vmatpush1.bf16.msra.mxu0 0
        %372 = vmatprep.subr.bf16.mxu0 %v356
        %373 = vmatpush1.bf16.msra.mxu0 %v353
        %374 = vmatprep.subr.bf16.mxu0 0
        %375 = vmatpush2.bf16.msra.mxu0 0
        %376 = vmatprep.subr.bf16.mxu0 0
        %377 = vmatpush2.bf16.msra.mxu0 0
        %378 = vmatprep.subr.bf16.mxu0 0
        %379 = vmatpush2.bf16.msra.mxu0 0
        %380 = vmatprep.subr.bf16.mxu0 0
        %381 = vmatpush2.bf16.msra.mxu0 0
        %382 = vmatprep.subr.bf16.mxu0 0
        %383 = vmatpush2.bf16.msra.mxu0 0
        %384 = vmatprep.subr.bf16.mxu0 0
        %385 = vmatpush2.bf16.msra.mxu0 0
        %386 = vmatprep.subr.bf16.mxu0 0
        %387 = vmatpush2.bf16.msra.mxu0 0
        %388 = vmatprep.subr.bf16.mxu0 0
        %389 = vmatpush2.bf16.msra.mxu0 0
        %390 = vmatprep.mubr.bf16.mxu0 0
        %391 = vmatmul.mubr.bf16.gmra.mxu0 %v349
        %v392 = vpop.f32.mrf.mxu0
        %v393 = vadd.f32 %v345, %v392
        %v394 = vpop.f32.mrf.mxu0
        %v395 = vadd.f32 %v345, %v394
        %v396 = vpop.f32.mrf.mxu0
        %v397 = vpop.f32.mrf.mxu0
        %398 = vdwg.mxu0
        %v399 = vmul.f32 %v393, %v393
        %v400 = vmul.f32 %v395, %v395
        %v401 = vmul.f32 %v393, %v399
        %v402 = vmul.f32 %v395, %v400
        %v403 = vmul.f32 %v401, 0.044715
        %v404 = vmul.f32 %v402, 0.044715
        %v405 = vadd.f32 %v393, %v403
        %v406 = vadd.f32 %v395, %v404
        %v407 = vmul.f32 %v405, 0.7978846
        %v408 = vmul.f32 %v406, 0.7978846
        %v409 = vtanh.pop %v407
        %v410 = vtanh.pop %v408
        %v411 = vadd.f32 %v409, 1.0
        %v412 = vadd.f32 %v410, 1.0
        %v413 = vmul.f32 %v411, 0.5
        %v414 = vmul.f32 %v412, 0.5
        %v415 = vmul.f32 %v393, %v413
        %v416 = vmul.f32 %v395, %v414
        %v417 = vadd.f32 %v415, %v255
        %v418 = vadd.f32 %v416, %v257
        %v421 = vcombine.low %v417, %v418
        %423 = vst [vmem:[%s242] sm:$0xff] %v421
        %s424 = sand.u32 %s153, 1
        %s425 = scalar_lea.sflag [#allocation3], %s424
        %s426 = sand.u32 %s153, 1
        %s427 = smul.addr %s426, 8
        %s428 = scalar_lea.vmem [#allocation2], %s427
        // Predicated region
        $region41: #{tpu_custom_call.1} parent=39 // pred_check
          %p429 = pneg %p163
        $region42: #{tpu_custom_call.1} parent=39 // pred_check_branch
          %431 = sbr.rel (%p429) target = $region44
        $region43: #{tpu_custom_call.1} parent=39 // pred_region
          %s432 = smul.u32 2, %s24
          %s434 = ssub.s32 128, 128
          %435 = vsyncadd %s425, %s434
          %s436 = smul.addr %s23, 2
          %s437 = sadd.s32 %s432, %s436
          %s438 = smul.addr %s437, 64
          %s439 = scalar_lea.hbm %s5, %s438
          %s441 = sshll.u32 %s428, 4
          %s442 = int_to_ptr.vmem [resolvable:$true] %s441
          %444 = dma.vmem_to_hbm [thread:$0]  %s442, 128, %s439, %s425
        $region44: #{tpu_custom_call.1} parent=39 // pred_fallthru
          _
      $region40: #{tpu_custom_call.1} parent=5 // pred_fallthru
        _
      %p445 = scmp.le.s32.totalorder 2, %s14
      // Predicated region
      $region45: #{tpu_custom_call.1} parent=5 // pred_check
        %p446 = pneg %p445
      $region46: #{tpu_custom_call.1} parent=5 // pred_check_branch
        %448 = sbr.rel (%p446) target = $region48
      $region47: #{tpu_custom_call.1} parent=5 // pred_region
        %s449 = ssub.s32 %s14, 2
        // Predicated region
        $region49: #{tpu_custom_call.1} parent=47 // pred_check
          %p450 = pneg %p169
        $region50: #{tpu_custom_call.1} parent=47 // pred_check_branch
          %452 = sbr.rel (%p450) target = $region52
        $region51: #{tpu_custom_call.1} parent=47 // pred_region
          %s453 = sand.u32 %s154, 1
          %s454 = scalar_lea.sflag [#allocation3], %s453
          %s455 = sand.u32 %s154, 1
          %s456 = smul.addr %s455, 8
          %s457 = scalar_lea.vmem [#allocation2], %s456
          %458 = dma.done %s454, 128
        $region52: #{tpu_custom_call.1} parent=47 // pred_fallthru
          _
      $region48: #{tpu_custom_call.1} parent=5 // pred_fallthru
        _
    $region6: #{tpu_custom_call.1} parent=1 // loop_footer
      %s18 = sadd.s32 1, %s14
    $region7: #{tpu_custom_call.1} parent=1 // loop_footer_branch
      %13 = sbr.rel target = $region3
    $region8: #{tpu_custom_call.1} parent=1 // loop_exit
      _
    %459 = vsyncpa [#allocation3], 1
    %s460 = scalar_lea.sflag [#allocation3], 1
    %461 = vsyncpa %s460, 1

</llo_original>
